<compile_context>
chip_gen: v7x
topology: tpu7x:2x2x1
jax: 0.10.0
libtpu: 0.0.40
codegen_flags: <defaults>
</compile_context>

<pallas_src>
import functools

import jax
import jax.numpy as jnp
from jax import lax
from jax.experimental import pallas as pl
from jax.experimental.pallas import tpu as pltpu

LANE = 128


def _round_up(v, m):
    return ((v + m - 1) // m) * m


def _masked_log_softmax(logits, num_classes):
    """log_softmax over the lane-padded class dim, masking padding columns."""
    col = lax.broadcasted_iota(jnp.int32, logits.shape, 1)
    logits = jnp.where(col < num_classes, logits, -1e30)
    mx = jnp.max(logits, axis=1, keepdims=True)
    z = logits - mx
    lse = jnp.log(jnp.sum(jnp.exp(z), axis=1, keepdims=True))
    return z - lse


# ---------------------------------------------------------------------------
# Fused path (whole problem VMEM-resident): linear -> prop -> prop + softmax.
# ---------------------------------------------------------------------------
def fused_kernel(adj_ref, d_ref, x_ref, w_ref, b_ref, o_ref, *, num_classes):
    d = d_ref[...]                                            # [n, 1] f32
    a = adj_ref[...]                                          # [n, n] bf16, raw A+I
    xw = jnp.dot(x_ref[...], w_ref[...], preferred_element_type=jnp.float32)
    m0 = (xw * d).astype(jnp.bfloat16)                        # D^{-1/2}(x W)
    h1 = jnp.dot(a, m0, preferred_element_type=jnp.float32)   # (A+I) m0
    m1 = (h1 * (d * d)).astype(jnp.bfloat16)                  # D^{-1} (A+I) m0
    h2 = jnp.dot(a, m1, preferred_element_type=jnp.float32)   # (A+I) m1
    logits = h2 * d + b_ref[...]                              # D^{-1/2}(...) + b
    o_ref[...] = _masked_log_softmax(logits, num_classes).astype(o_ref.dtype)


# ---------------------------------------------------------------------------
# Tiled path kernel 1: m0 = D^{-1/2} (x @ W)    (bf16 MXU, f32 scaling)
# ---------------------------------------------------------------------------
def linear_scale_kernel(x_ref, w_ref, d_ref, o_ref):
    xw = jnp.dot(x_ref[...], w_ref[...], preferred_element_type=jnp.float32)
    o_ref[...] = (xw * d_ref[...]).astype(o_ref.dtype)


# ---------------------------------------------------------------------------
# Tiled path kernel 2: m1 = D^{-1} ((A+I) @ m0)
#   adjacency stored int8 in HBM, cast to bf16 right before the MXU;
#   m0 is fully VMEM-resident (constant-index BlockSpec) and sliced in-kernel.
# ---------------------------------------------------------------------------
def propagate_kernel(adj_ref, d_ref, m_ref, o_ref, acc_ref, *, tile):
    k = pl.program_id(1)

    @pl.when(k == 0)
    def _():
        acc_ref[...] = jnp.zeros_like(acc_ref)

    a = adj_ref[...].astype(jnp.bfloat16)                     # raw A+I tile
    start = pl.multiple_of(k * tile, tile)
    m = m_ref[pl.ds(start, tile), :]                          # resident message slice
    acc_ref[...] += jnp.dot(a, m, preferred_element_type=jnp.float32)

    @pl.when(k == pl.num_programs(1) - 1)
    def _():
        d = d_ref[...]                                        # f32 [tile, 1]
        o_ref[...] = (acc_ref[...] * (d * d)).astype(o_ref.dtype)


# ---------------------------------------------------------------------------
# Tiled path kernel 3: out = log_softmax(D^{-1/2} ((A+I) @ m1) + b)
# ---------------------------------------------------------------------------
def propagate_final_kernel(adj_ref, d_ref, m_ref, b_ref, o_ref, acc_ref, *,
                           tile, num_classes):
    k = pl.program_id(1)

    @pl.when(k == 0)
    def _():
        acc_ref[...] = jnp.zeros_like(acc_ref)

    a = adj_ref[...].astype(jnp.bfloat16)
    start = pl.multiple_of(k * tile, tile)
    m = m_ref[pl.ds(start, tile), :]
    acc_ref[...] += jnp.dot(a, m, preferred_element_type=jnp.float32)

    @pl.when(k == pl.num_programs(1) - 1)
    def _():
        logits = acc_ref[...] * d_ref[...] + b_ref[...]       # f32 [tile, cp]
        o_ref[...] = _masked_log_softmax(logits, num_classes).astype(o_ref.dtype)


# ---------------------------------------------------------------------------
# Wrapper
# ---------------------------------------------------------------------------
def sgc_net_forward(x, edge_index, weight, bias, *, tile=512, force_tiled=False):
    """SGC(K=2) + log_softmax(dim=1).
    x: [N, F] f32, edge_index: [2, E] int32,
    weight: [F, C] (transpose of torch Linear's [C, F]), bias: [C]."""
    n, f = x.shape
    c = weight.shape[1]
    row, col = edge_index[0], edge_index[1]
    e = int(row.shape[0])

    # Degrees via segment_sum (out-degree + self loop); matches PyG SGConv for
    # undirected / symmetric edge lists.
    deg = jax.ops.segment_sum(jnp.ones((e,), jnp.float32), row, num_segments=n) + 1.0
    d_inv_sqrt = jnp.where(deg > 0, lax.rsqrt(deg), 0.0)

    cp = _round_up(c, LANE)                       # lane-dense class dim (>= 128)

    # Fused single-kernel path when the whole adjacency comfortably fits VMEM.
    fused = (not force_tiled) and (_round_up(n, 8) <= 1024)
    if fused:
        n_pad = _round_up(n, 8)
    else:
        t = tile
        n_pad = _round_up(n, t)

    # Adjacency with self loops, built directly at the padded shape.  bf16 holds
    # the small edge counts exactly; the tiled path narrows it to int8 storage.
    # TODO(synk): scatter directly into int8 (fp8 on v7x) to skip the cast pass;
    #             the scatter itself has no rectangular BlockSpec form -> XLA glue.
    ar = jnp.arange(n, dtype=jnp.int32)
    adj_bf = (jnp.zeros((n_pad, n_pad), jnp.bfloat16)
              .at[row, col].add(jnp.ones((e,), jnp.bfloat16))
              .at[ar, ar].add(jnp.ones((n,), jnp.bfloat16)))

    d_p = jnp.zeros((n_pad, 1), jnp.float32).at[:n, 0].set(d_inv_sqrt)
    x_p = jnp.zeros((n_pad, f), jnp.bfloat16).at[:n, :].set(x.astype(jnp.bfloat16))
    w_p = jnp.zeros((f, cp), jnp.bfloat16).at[:, :c].set(weight.astype(jnp.bfloat16))
    b_p = jnp.zeros((1, cp), jnp.float32).at[0, :c].set(bias.astype(jnp.float32))

    vmem_limit = 32 * 1024 * 1024   # v7x-friendly (64 MiB physical, 32 scoped)

    if fused:
        out_p = pl.pallas_call(
            functools.partial(fused_kernel, num_classes=c),
            out_shape=jax.ShapeDtypeStruct((n_pad, cp), jnp.float32),
            grid_spec=pltpu.PrefetchScalarGridSpec(
                num_scalar_prefetch=0,
                grid=(1,),
                in_specs=[pl.BlockSpec((n_pad, n_pad), lambda i: (0, 0)),
                          pl.BlockSpec((n_pad, 1), lambda i: (0, 0)),
                          pl.BlockSpec((n_pad, f), lambda i: (0, 0)),
                          pl.BlockSpec((f, cp), lambda i: (0, 0)),
                          pl.BlockSpec((1, cp), lambda i: (0, 0))],
                out_specs=pl.BlockSpec((n_pad, cp), lambda i: (0, 0)),
            ),
            compiler_params=pltpu.CompilerParams(
                dimension_semantics=("arbitrary",),
                vmem_limit_bytes=vmem_limit),
            cost_estimate=pl.CostEstimate(
                flops=2 * n_pad * f * cp + 4 * n_pad * n_pad * cp,
                transcendentals=n_pad * cp,
                bytes_accessed=(n_pad * n_pad * 2 + n_pad * f * 2 + f * cp * 2
                                + n_pad * 4 + cp * 4 + n_pad * cp * 4)),
        )(adj_bf, d_p, x_p, w_p, b_p)
        return out_p[:n, :c]

    # ------------------------- tiled (large-N) path --------------------------
    adj_i8 = adj_bf.astype(jnp.int8)              # narrow HBM stream (exact counts)
    grid_rows = n_pad // t
    grid_k = n_pad // t

    # Kernel 1: m0 = D^{-1/2} (x @ W)
    m0 = pl.pallas_call(
        linear_scale_kernel,
        out_shape=jax.ShapeDtypeStruct((n_pad, cp), jnp.bfloat16),
        grid_spec=pltpu.PrefetchScalarGridSpec(
            num_scalar_prefetch=0,
            grid=(grid_rows,),
            in_specs=[pl.BlockSpec((t, f), lambda i: (i, 0)),
                      pl.BlockSpec((f, cp), lambda i: (0, 0)),
                      pl.BlockSpec((t, 1), lambda i: (i, 0))],
            out_specs=pl.BlockSpec((t, cp), lambda i: (i, 0)),
        ),
        compiler_params=pltpu.CompilerParams(
            dimension_semantics=("parallel",),
            vmem_limit_bytes=vmem_limit),
        cost_estimate=pl.CostEstimate(
            flops=2 * n_pad * f * cp, transcendentals=0,
            bytes_accessed=n_pad * f * 2 + f * cp * 2 + n_pad * 4 + n_pad * cp * 2),
    )(x_p, w_p, d_p)

    # Kernel 2: m1 = D^{-1} ((A+I) @ m0)
    m1 = pl.pallas_call(
        functools.partial(propagate_kernel, tile=t),
        out_shape=jax.ShapeDtypeStruct((n_pad, cp), jnp.bfloat16),
        grid_spec=pltpu.PrefetchScalarGridSpec(
            num_scalar_prefetch=0,
            grid=(grid_rows, grid_k),
            in_specs=[pl.BlockSpec((t, t), lambda i, k: (i, k)),
                      pl.BlockSpec((t, 1), lambda i, k: (i, 0)),
                      pl.BlockSpec((n_pad, cp), lambda i, k: (0, 0))],  # resident
            out_specs=pl.BlockSpec((t, cp), lambda i, k: (i, 0)),
            scratch_shapes=[pltpu.VMEM((t, cp), jnp.float32)],
        ),
        compiler_params=pltpu.CompilerParams(
            dimension_semantics=("parallel", "arbitrary"),
            vmem_limit_bytes=vmem_limit),
        cost_estimate=pl.CostEstimate(
            flops=2 * n_pad * n_pad * cp, transcendentals=0,
            bytes_accessed=(n_pad * n_pad * 1 + n_pad * cp * 2
                            + n_pad * 4 + n_pad * cp * 2)),
    )(adj_i8, d_p, m0)

    # Kernel 3: out = log_softmax(D^{-1/2} ((A+I) @ m1) + b)
    out_p = pl.pallas_call(
        functools.partial(propagate_final_kernel, tile=t, num_classes=c),
        out_shape=jax.ShapeDtypeStruct((n_pad, cp), jnp.float32),
        grid_spec=pltpu.PrefetchScalarGridSpec(
            num_scalar_prefetch=0,
            grid=(grid_rows, grid_k),
            in_specs=[pl.BlockSpec((t, t), lambda i, k: (i, k)),
                      pl.BlockSpec((t, 1), lambda i, k: (i, 0)),
                      pl.BlockSpec((n_pad, cp), lambda i, k: (0, 0)),    # resident
                      pl.BlockSpec((1, cp), lambda i, k: (0, 0))],
            out_specs=pl.BlockSpec((t, cp), lambda i, k: (i, 0)),
            scratch_shapes=[pltpu.VMEM((t, cp), jnp.float32)],
        ),
        compiler_params=pltpu.CompilerParams(
            dimension_semantics=("parallel", "arbitrary"),
            vmem_limit_bytes=vmem_limit),
        cost_estimate=pl.CostEstimate(
            flops=2 * n_pad * n_pad * cp, transcendentals=n_pad * cp,
            bytes_accessed=(n_pad * n_pad * 1 + n_pad * cp * 2
                            + n_pad * 4 + cp * 4 + n_pad * cp * 4)),
    )(adj_i8, d_p, m1, b_p)

    return out_p[:n, :c]


if __name__ == "__main__":
    key = jax.random.PRNGKey(0)
    k1, k2, k3, k4, k5 = jax.random.split(key, 5)

    F_IN, C = 32, 8

    # Deterministic parameter init (stand-in for torch Linear init).
    wk, bk = jax.random.split(k4)
    scale = 1.0 / jnp.sqrt(jnp.float32(F_IN))
    weight = jax.random.uniform(wk, (F_IN, C), jnp.float32, -scale, scale)
    bias = jax.random.uniform(bk, (C,), jnp.float32, -scale, scale)

    def make_graph(kx, ke, n, n_edges):
        ka, kb = jax.random.split(ke)
        xg = jax.random.normal(kx, (n, F_IN), dtype=jnp.float32)
        src = jax.random.randint(ka, (n_edges,), 0, n, dtype=jnp.int32)
        dst = jax.random.randint(kb, (n_edges,), 0, n, dtype=jnp.int32)
        return xg, jnp.stack([src, dst], axis=0)

    def reference(xg, ei):
        n = xg.shape[0]
        adj = jnp.zeros((n, n), jnp.float32).at[ei[0], ei[1]].add(1.0)
        adj = adj + jnp.eye(n, dtype=jnp.float32)
        deg = jnp.sum(adj, axis=1)
        dis = jnp.where(deg > 0, lax.rsqrt(deg), 0.0)
        a_hat = dis[:, None] * adj * dis[None, :]
        h = a_hat @ (a_hat @ (xg @ weight)) + bias[None, :]
        return jax.nn.log_softmax(h, axis=1)

    # 1) Small graph -> fused single-kernel path (everything VMEM-resident).
    x_s, ei_s = make_graph(k1, k2, 16, 48)
    out_s = jax.block_until_ready(sgc_net_forward(x_s, ei_s, weight, bias))
    ref_s = reference(x_s, ei_s)
    assert out_s.shape == (16, C)
    assert bool(jnp.all(jnp.abs(jnp.sum(jnp.exp(out_s), axis=1) - 1.0) < 1e-4))
    assert bool(jnp.max(jnp.abs(out_s - ref_s)) < 0.1)

    # 2) Larger graph, force the tiled path (int8 adjacency stream, resident msg).
    x_l, ei_l = make_graph(k3, k5, 700, 4000)
    out_l = jax.block_until_ready(
        sgc_net_forward(x_l, ei_l, weight, bias, force_tiled=True))
    ref_l = reference(x_l, ei_l)
    assert out_l.shape == (700, C)
    assert bool(jnp.all(jnp.abs(jnp.sum(jnp.exp(out_l), axis=1) - 1.0) < 1e-4))
    assert bool(jnp.max(jnp.abs(out_l - ref_l)) < 0.1)

    print("KERNEL_OK")
</pallas_src>

<mosaic_0001>
module attributes {stable_mosaic.version = 11 : i64} {
  func.func @fused_kernel(%arg0: i32, %arg1: memref<16x16xbf16, #tpu.memory_space<vmem>>, %arg2: memref<16x1xf32, #tpu.memory_space<vmem>>, %arg3: memref<16x32xbf16, #tpu.memory_space<vmem>>, %arg4: memref<32x128xbf16, #tpu.memory_space<vmem>>, %arg5: memref<1x128xf32, #tpu.memory_space<vmem>>, %arg6: memref<16x128xf32, #tpu.memory_space<vmem>>) attributes {dimension_semantics = [#tpu.dimension_semantics<arbitrary>], iteration_bounds = array<i64: 1>, scalar_prefetch = 0 : i64, scratch_operands = 0 : i64, tpu.core_type = #tpu.core_type<tc>, window_params = [{pipeline_mode = #tpu.pipeline_mode<synchronous>, transform_indices = @transform_0, window_bounds = array<i64: 16, 16>}, {pipeline_mode = #tpu.pipeline_mode<synchronous>, transform_indices = @transform_1, window_bounds = array<i64: 16, 1>}, {pipeline_mode = #tpu.pipeline_mode<synchronous>, transform_indices = @transform_2, window_bounds = array<i64: 16, 32>}, {pipeline_mode = #tpu.pipeline_mode<synchronous>, transform_indices = @transform_3, window_bounds = array<i64: 32, 128>}, {pipeline_mode = #tpu.pipeline_mode<synchronous>, transform_indices = @transform_4, window_bounds = array<i64: 1, 128>}, {pipeline_mode = #tpu.pipeline_mode<synchronous>, transform_indices = @transform_5, window_bounds = array<i64: 16, 128>}]} {
    %c0 = arith.constant 0 : index
    %c0_0 = arith.constant 0 : index
    %0 = vector.load %arg2[%c0, %c0_0] : memref<16x1xf32, #tpu.memory_space<vmem>>, vector<16x1xf32>
    %c0_1 = arith.constant 0 : index
    %c0_2 = arith.constant 0 : index
    %1 = vector.load %arg1[%c0_1, %c0_2] : memref<16x16xbf16, #tpu.memory_space<vmem>>, vector<16x16xbf16>
    %c0_3 = arith.constant 0 : index
    %c0_4 = arith.constant 0 : index
    %2 = vector.load %arg3[%c0_3, %c0_4] : memref<16x32xbf16, #tpu.memory_space<vmem>>, vector<16x32xbf16>
    %c0_5 = arith.constant 0 : index
    %c0_6 = arith.constant 0 : index
    %3 = vector.load %arg4[%c0_5, %c0_6] : memref<32x128xbf16, #tpu.memory_space<vmem>>, vector<32x128xbf16>
    %cst = arith.constant dense<0.000000e+00> : vector<16x128xf32>
    %4 = tpu.matmul %2, %3, %cst {dimension_numbers = #tpu.dot_dimension_numbers<[1], [0], [0], [1], [0, 0, 1, 1], [], []>} : vector<16x32xbf16>, vector<32x128xbf16>, vector<16x128xf32> -> vector<16x128xf32>
    %5 = vector.broadcast %0 : vector<16x1xf32> to vector<16x128xf32>
    %6 = arith.mulf %4, %5 : vector<16x128xf32>
    %7 = arith.truncf %6 : vector<16x128xf32> to vector<16x128xbf16>
    %cst_7 = arith.constant dense<0.000000e+00> : vector<16x128xf32>
    %8 = tpu.matmul %1, %7, %cst_7 {dimension_numbers = #tpu.dot_dimension_numbers<[1], [0], [0], [1], [0, 0, 1, 1], [], []>} : vector<16x16xbf16>, vector<16x128xbf16>, vector<16x128xf32> -> vector<16x128xf32>
    %9 = arith.mulf %0, %0 : vector<16x1xf32>
    %10 = vector.broadcast %9 : vector<16x1xf32> to vector<16x128xf32>
    %11 = arith.mulf %8, %10 : vector<16x128xf32>
    %12 = arith.truncf %11 : vector<16x128xf32> to vector<16x128xbf16>
    %cst_8 = arith.constant dense<0.000000e+00> : vector<16x128xf32>
    %13 = tpu.matmul %1, %12, %cst_8 {dimension_numbers = #tpu.dot_dimension_numbers<[1], [0], [0], [1], [0, 0, 1, 1], [], []>} : vector<16x16xbf16>, vector<16x128xbf16>, vector<16x128xf32> -> vector<16x128xf32>
    %14 = vector.broadcast %0 : vector<16x1xf32> to vector<16x128xf32>
    %15 = arith.mulf %13, %14 : vector<16x128xf32>
    %c0_9 = arith.constant 0 : index
    %c0_10 = arith.constant 0 : index
    %16 = vector.load %arg5[%c0_9, %c0_10] : memref<1x128xf32, #tpu.memory_space<vmem>>, vector<1x128xf32>
    %17 = vector.broadcast %16 : vector<1x128xf32> to vector<16x128xf32>
    %18 = arith.addf %15, %17 : vector<16x128xf32>
    %19 = tpu.iota {dimensions = array<i32: 1>} : vector<16x128xi32>
    %c8_i32 = arith.constant 8 : i32
    %20 = vector.broadcast %c8_i32 : i32 to vector<16x128xi32>
    %21 = arith.cmpi slt, %19, %20 : vector<16x128xi32>
    %cst_11 = arith.constant -1.000000e+30 : f32
    %22 = vector.broadcast %cst_11 : f32 to vector<16x128xf32>
    %23 = arith.select %21, %18, %22 : vector<16x128xi1>, vector<16x128xf32>
    %cst_12 = arith.constant dense<0xFF800000> : vector<16xf32>
    %24 = vector.multi_reduction <maximumf>, %23, %cst_12 [1] : vector<16x128xf32> to vector<16xf32>
    %25 = vector.shape_cast %24 : vector<16xf32> to vector<16x1xf32>
    %26 = vector.broadcast %25 : vector<16x1xf32> to vector<16x128xf32>
    %27 = arith.subf %23, %26 : vector<16x128xf32>
    %28 = math.exp %27 : vector<16x128xf32>
    %cst_13 = arith.constant dense<0.000000e+00> : vector<16xf32>
    %29 = vector.multi_reduction <add>, %28, %cst_13 [1] : vector<16x128xf32> to vector<16xf32>
    %30 = vector.shape_cast %29 : vector<16xf32> to vector<16x1xf32>
    %31 = math.log %30 : vector<16x1xf32>
    %32 = vector.broadcast %31 : vector<16x1xf32> to vector<16x128xf32>
    %33 = arith.subf %27, %32 : vector<16x128xf32>
    %c0_14 = arith.constant 0 : index
    %c0_15 = arith.constant 0 : index
    %34 = vector.load %arg6[%c0_14, %c0_15] : memref<16x128xf32, #tpu.memory_space<vmem>>, vector<16x128xf32>
    tpu.vector_store %arg6[%c0_14, %c0_15], %33 {strides = array<i32>} : memref<16x128xf32, #tpu.memory_space<vmem>>, vector<16x128xf32>,
    return
  }
  func.func @transform_0(%arg0: i32) -> (i32, i32) {
    %c0_i32 = arith.constant 0 : i32
    %c0_i32_0 = arith.constant 0 : i32
    %c0_i32_1 = arith.constant 0 : i32
    return %c0_i32, %c0_i32_0 : i32, i32
  }
  func.func @transform_1(%arg0: i32) -> (i32, i32) {
    %c0_i32 = arith.constant 0 : i32
    %c0_i32_0 = arith.constant 0 : i32
    %c0_i32_1 = arith.constant 0 : i32
    return %c0_i32, %c0_i32_0 : i32, i32
  }
  func.func @transform_2(%arg0: i32) -> (i32, i32) {
    %c0_i32 = arith.constant 0 : i32
    %c0_i32_0 = arith.constant 0 : i32
    %c0_i32_1 = arith.constant 0 : i32
    return %c0_i32, %c0_i32_0 : i32, i32
  }
  func.func @transform_3(%arg0: i32) -> (i32, i32) {
    %c0_i32 = arith.constant 0 : i32
    %c0_i32_0 = arith.constant 0 : i32
    %c0_i32_1 = arith.constant 0 : i32
    return %c0_i32, %c0_i32_0 : i32, i32
  }
  func.func @transform_4(%arg0: i32) -> (i32, i32) {
    %c0_i32 = arith.constant 0 : i32
    %c0_i32_0 = arith.constant 0 : i32
    %c0_i32_1 = arith.constant 0 : i32
    return %c0_i32, %c0_i32_0 : i32, i32
  }
  func.func @transform_5(%arg0: i32) -> (i32, i32) {
    %c0_i32 = arith.constant 0 : i32
    %c0_i32_0 = arith.constant 0 : i32
    %c0_i32_1 = arith.constant 0 : i32
    return %c0_i32, %c0_i32_0 : i32, i32
  }
}

</mosaic_0001>

<llo_original>
// kernel: tpu_custom_call.1
$region0: #{tpu_custom_call.1}
  #allocation0 [shape = 'u32[]', space=smem, size = 0x4, offset = 0x4, fixed_abs, tag = 'smem constant byte address 0x4 - core index']
  #allocation1 [shape = 'u32[144,128]{1,0:T(1,128)}', space=vmem, size = 0x12000, scoped, tag = 'internal scratch']
  %s0 = inlined_call_operand.vmem [shape: bf16[16,16], index: 0, kind: input, shape index: {}]
  %s1 = inlined_call_operand.vmem [shape: f32[16,1], index: 1, kind: input, shape index: {}]
  %s2 = inlined_call_operand.hbm [shape: bf16[16,32], index: 2, kind: input, shape index: {}]
  %s3 = inlined_call_operand.vmem [shape: bf16[32,128], index: 3, kind: input, shape index: {}]
  %s4 = inlined_call_operand.vmem [shape: f32[1,128], index: 4, kind: input, shape index: {}]
  %s5 = inlined_call_operand.hbm [shape: f32[16,128], index: 5, kind: output, shape index: {}]
  %s6 = sld [smem:[#allocation0]]
  $region34: #{tpu_custom_call.1} parent=0
    _
  %s8 = ssub.s32 1, %s6
  %s9 = scalar_select 0, %s8, %s6
  $region1: #{tpu_custom_call.1} parent=0
    #allocation2 [shape = 'u8[4096]{0}', space=vmem, size = 0x1000, scoped, tag = 'input window, operand 2, single buffered']
    #allocation3 [shape = 's32[1]{0}', space=sflag, size = 0x4, scoped, tag = 'scoped memory for tpu_custom_call.1']
    #allocation4 [shape = 's32[1]{0}', space=sflag, size = 0x4, scoped, tag = 'scoped memory for tpu_custom_call.1']
    #allocation5 [shape = 'u8[8192]{0}', space=vmem, size = 0x2000, scoped, tag = 'output window, operand 0, single buffered']
    %10 = vsyncpa [#allocation3], 0
    %11 = vsyncpa [#allocation4], 0
    // Predicated region
    $region2: #{tpu_custom_call.1} parent=1 // pred_check
      _
    $region3: #{tpu_custom_call.1} parent=1 // pred_check_branch
      %13 = sbr.rel (0) target = $region5
    $region4: #{tpu_custom_call.1} parent=1 // pred_region
      _
    $region5: #{tpu_custom_call.1} parent=1 // pred_fallthru
      _
    // Predicated region
    $region6: #{tpu_custom_call.1} parent=1 // pred_check
      _
    $region7: #{tpu_custom_call.1} parent=1 // pred_check_branch
      %15 = sbr.rel (0) target = $region9
    $region8: #{tpu_custom_call.1} parent=1 // pred_region
      _
    $region9: #{tpu_custom_call.1} parent=1 // pred_fallthru
      _
    // Predicated region
    $region10: #{tpu_custom_call.1} parent=1 // pred_check
      _
    $region11: #{tpu_custom_call.1} parent=1 // pred_check_branch
      %17 = sbr.rel (0) target = $region13
    $region12: #{tpu_custom_call.1} parent=1 // pred_region
      %s19 = ssub.s32 128, 128
      %20 = vsyncadd [#allocation3], %s19
      %s21 = sshll.u32 [#allocation2], 4
      %s22 = int_to_ptr.vmem [resolvable:$true] %s21
      %27 = dma.hbm_to_vmem [thread:$0]  %s2, 128, %s22, [#allocation3], 64, 64, 4
    $region13: #{tpu_custom_call.1} parent=1 // pred_fallthru
      _
    // Predicated region
    $region14: #{tpu_custom_call.1} parent=1 // pred_check
      _
    $region15: #{tpu_custom_call.1} parent=1 // pred_check_branch
      %29 = sbr.rel (0) target = $region17
    $region16: #{tpu_custom_call.1} parent=1 // pred_region
      _
    $region17: #{tpu_custom_call.1} parent=1 // pred_fallthru
      _
    // Predicated region
    $region18: #{tpu_custom_call.1} parent=1 // pred_check
      _
    $region19: #{tpu_custom_call.1} parent=1 // pred_check_branch
      %31 = sbr.rel (0) target = $region21
    $region20: #{tpu_custom_call.1} parent=1 // pred_region
      _
    $region21: #{tpu_custom_call.1} parent=1 // pred_fallthru
      _
    // Predicated region
    $region22: #{tpu_custom_call.1} parent=1 // pred_check
      _
    $region23: #{tpu_custom_call.1} parent=1 // pred_check_branch
      %33 = sbr.rel (0) target = $region25
    $region24: #{tpu_custom_call.1} parent=1 // pred_region
      %34 = dma.done [#allocation3], 128
    $region25: #{tpu_custom_call.1} parent=1 // pred_fallthru
      _
    %v36 = vld [vmem:[%s1] sm:$0xff]
    %v37 = vld [vmem:[%s1 + $0x8] sm:$0xff]
    %v38 = vld [vmem:[%s0] sm:$0xf]
    %v39 = vld [vmem:[%s0 + $0x4] sm:$0xf]
    %v40 = vld [vmem:[#allocation2] sm:$0xf]
    %v41 = vld [vmem:[#allocation2 + $0x4] sm:$0xf]
    %v42 = vld [vmem:[%s3] sm:$0xf]
    %v43 = vld [vmem:[%s3 + $0x4] sm:$0xf]
    %v44 = vld [vmem:[%s3 + $0x8] sm:$0xf]
    %v45 = vld [vmem:[%s3 + $0xc] sm:$0xf]
    %v48 = vunpack.c.l.b16 %v40
    %v49 = vunpack.c.l.b16 %v41
    %v50 = vpack.c.b16 %v49, %v48
    %v55 = vunpack.c.l.b16 %v42
    %v56 = vunpack.c.l.b16 %v43
    %v57 = vunpack.c.l.b16 %v44
    %v58 = vunpack.c.l.b16 %v45
    %v59 = vpack.c.b16 %v56, %v55
    %v60 = vpack.c.b16 %v58, %v57
    %vm63 = vcmask 261120
    %v65 = vsel %vm63, %v50, 0
    %67 = vmatprep.subr.bf16.mxu0 0
    %68 = vmatpush1.bf16.msra.mxu0 %v59
    %69 = vmatprep.subr.bf16.mxu0 0
    %70 = vmatpush1.bf16.msra.mxu0 %v60
    %71 = vmatprep.subr.bf16.mxu0 0
    %72 = vmatpush1.bf16.msra.mxu0 0
    %73 = vmatprep.subr.bf16.mxu0 0
    %74 = vmatpush1.bf16.msra.mxu0 0
    %75 = vmatprep.subr.bf16.mxu0 0
    %76 = vmatpush1.bf16.msra.mxu0 0
    %77 = vmatprep.subr.bf16.mxu0 0
    %78 = vmatpush1.bf16.msra.mxu0 0
    %79 = vmatprep.subr.bf16.mxu0 0
    %80 = vmatpush1.bf16.msra.mxu0 0
    %81 = vmatprep.subr.bf16.mxu0 0
    %82 = vmatpush1.bf16.msra.mxu0 0
    %83 = vmatprep.subr.bf16.mxu0 0
    %84 = vmatpush1.bf16.msra.mxu0 0
    %85 = vmatprep.subr.bf16.mxu0 0
    %86 = vmatpush1.bf16.msra.mxu0 0
    %87 = vmatprep.subr.bf16.mxu0 0
    %88 = vmatpush1.bf16.msra.mxu0 0
    %89 = vmatprep.subr.bf16.mxu0 0
    %90 = vmatpush1.bf16.msra.mxu0 0
    %91 = vmatprep.subr.bf16.mxu0 0
    %92 = vmatpush1.bf16.msra.mxu0 0
    %93 = vmatprep.subr.bf16.mxu0 0
    %94 = vmatpush1.bf16.msra.mxu0 0
    %95 = vmatprep.subr.bf16.mxu0 0
    %96 = vmatpush1.bf16.msra.mxu0 0
    %97 = vmatprep.subr.bf16.mxu0 0
    %98 = vmatpush1.bf16.msra.mxu0 0
    %99 = vmatprep.mubr.bf16.mxu0 0
    %100 = vmatmul.mubr.bf16.gmra.mrb[0].mxu0 %v65
    %v101 = vpop.f32.mrb[0].mxu0
    %v102 = vadd.f32 0.0, %v101
    %v103 = vpop.f32.mrb[0].mxu0
    %v104 = vpop.f32.mrb[0].mxu0
    %v105 = vadd.f32 0.0, %v104
    %v106 = vpop.f32.mrb[0].mxu0
    %107 = vdwg.mxu0
    %109 = vset.pattern.permute.xlu0 0
    %110 = vperm.xlu0 %109, %v36
    %v111 = vpop.permute.xlu0 %110
    %114 = vset.pattern.permute.xlu0 0
    %115 = vperm.xlu0 %114, %v37
    %v116 = vpop.permute.xlu0 %115
    %v118 = vmul.f32 %v102, %v111
    %v119 = vmul.f32 %v105, %v116
    %v120 = vpack.c.bf16 %v119, %v118
    %v123 = vunpack.c.l.b16 %v38
    %v124 = vunpack.c.l.b16 %v39
    %v125 = vpack.c.b16 %v124, %v123
    %vm126 = vcmask 130048
    %v128 = vsel %vm126, %v125, 0
    %130 = vmatprep.subr.bf16.mxu0 0
    %131 = vmatpush1.bf16.msra.mxu0 %v120
    %132 = vmatprep.subr.bf16.mxu0 0
    %133 = vmatpush1.bf16.msra.mxu0 0
    %134 = vmatprep.subr.bf16.mxu0 0
    %135 = vmatpush1.bf16.msra.mxu0 0
    %136 = vmatprep.subr.bf16.mxu0 0
    %137 = vmatpush1.bf16.msra.mxu0 0
    %138 = vmatprep.subr.bf16.mxu0 0
    %139 = vmatpush1.bf16.msra.mxu0 0
    %140 = vmatprep.subr.bf16.mxu0 0
    %141 = vmatpush1.bf16.msra.mxu0 0
    %142 = vmatprep.subr.bf16.mxu0 0
    %143 = vmatpush1.bf16.msra.mxu0 0
    %144 = vmatprep.subr.bf16.mxu0 0
    %145 = vmatpush1.bf16.msra.mxu0 0
    %146 = vmatprep.subr.bf16.mxu0 0
    %147 = vmatpush1.bf16.msra.mxu0 0
    %148 = vmatprep.subr.bf16.mxu0 0
    %149 = vmatpush1.bf16.msra.mxu0 0
    %150 = vmatprep.subr.bf16.mxu0 0
    %151 = vmatpush1.bf16.msra.mxu0 0
    %152 = vmatprep.subr.bf16.mxu0 0
    %153 = vmatpush1.bf16.msra.mxu0 0
    %154 = vmatprep.subr.bf16.mxu0 0
    %155 = vmatpush1.bf16.msra.mxu0 0
    %156 = vmatprep.subr.bf16.mxu0 0
    %157 = vmatpush1.bf16.msra.mxu0 0
    %158 = vmatprep.subr.bf16.mxu0 0
    %159 = vmatpush1.bf16.msra.mxu0 0
    %160 = vmatprep.subr.bf16.mxu0 0
    %161 = vmatpush1.bf16.msra.mxu0 0
    %162 = vmatprep.mubr.bf16.mxu0 0
    %163 = vmatmul.mubr.bf16.gmra.mrb[0].mxu0 %v128
    %v164 = vpop.f32.mrb[0].mxu0
    %v165 = vadd.f32 0.0, %v164
    %v166 = vpop.f32.mrb[0].mxu0
    %v167 = vpop.f32.mrb[0].mxu0
    %v168 = vadd.f32 0.0, %v167
    %v169 = vpop.f32.mrb[0].mxu0
    %170 = vdwg.mxu0
    %v171 = vmul.f32 %v36, %v36
    %v172 = vmul.f32 %v37, %v37
    %174 = vset.pattern.permute.xlu0 0
    %175 = vperm.xlu0 %174, %v171
    %v176 = vpop.permute.xlu0 %175
    %179 = vset.pattern.permute.xlu0 0
    %180 = vperm.xlu0 %179, %v172
    %v181 = vpop.permute.xlu0 %180
    %v183 = vmul.f32 %v165, %v176
    %v184 = vmul.f32 %v168, %v181
    %v185 = vpack.c.bf16 %v184, %v183
    %186 = vmatprep.subr.bf16.mxu0 0
    %187 = vmatpush1.bf16.msra.mxu0 %v185
    %188 = vmatprep.subr.bf16.mxu0 0
    %189 = vmatpush1.bf16.msra.mxu0 0
    %190 = vmatprep.subr.bf16.mxu0 0
    %191 = vmatpush1.bf16.msra.mxu0 0
    %192 = vmatprep.subr.bf16.mxu0 0
    %193 = vmatpush1.bf16.msra.mxu0 0
    %194 = vmatprep.subr.bf16.mxu0 0
    %195 = vmatpush1.bf16.msra.mxu0 0
    %196 = vmatprep.subr.bf16.mxu0 0
    %197 = vmatpush1.bf16.msra.mxu0 0
    %198 = vmatprep.subr.bf16.mxu0 0
    %199 = vmatpush1.bf16.msra.mxu0 0
    %200 = vmatprep.subr.bf16.mxu0 0
    %201 = vmatpush1.bf16.msra.mxu0 0
    %202 = vmatprep.subr.bf16.mxu0 0
    %203 = vmatpush1.bf16.msra.mxu0 0
    %204 = vmatprep.subr.bf16.mxu0 0
    %205 = vmatpush1.bf16.msra.mxu0 0
    %206 = vmatprep.subr.bf16.mxu0 0
    %207 = vmatpush1.bf16.msra.mxu0 0
    %208 = vmatprep.subr.bf16.mxu0 0
    %209 = vmatpush1.bf16.msra.mxu0 0
    %210 = vmatprep.subr.bf16.mxu0 0
    %211 = vmatpush1.bf16.msra.mxu0 0
    %212 = vmatprep.subr.bf16.mxu0 0
    %213 = vmatpush1.bf16.msra.mxu0 0
    %214 = vmatprep.subr.bf16.mxu0 0
    %215 = vmatpush1.bf16.msra.mxu0 0
    %216 = vmatprep.subr.bf16.mxu0 0
    %217 = vmatpush1.bf16.msra.mxu0 0
    %218 = vmatprep.mubr.bf16.mxu0 0
    %219 = vmatmul.mubr.bf16.gmra.mrb[0].mxu0 %v128
    %v220 = vpop.f32.mrb[0].mxu0
    %v221 = vadd.f32 0.0, %v220
    %v222 = vpop.f32.mrb[0].mxu0
    %v223 = vpop.f32.mrb[0].mxu0
    %v224 = vadd.f32 0.0, %v223
    %v225 = vpop.f32.mrb[0].mxu0
    %226 = vdwg.mxu0
    %v227 = vmul.f32 %v221, %v111
    %v228 = vmul.f32 %v224, %v116
    %v229 = vld [vmem:[%s4] sm:$0x1]
    %v231 = vlaneseq
    %v232 = vshrl.u32 %v231, 7
    %v233 = vsub.s32 0, %v232
    %v234 = vrot.slane %v229, %v233
    %v236 = vadd.f32 %v227, %v234
    %v237 = vadd.f32 %v228, %v234
    %v238 = vlaneseq
    %v239 = vand.u32 %v238, 127
    %vm240 = vcmp.lt.s32.totalorder %v239, 8
    %v241 = vsel %vm240, %v236, -1e+30
    %v242 = vsel %vm240, %v237, -1e+30
    %243 = vmax.xlane.f32.xlu0 %v241
    %v244 = vpop.xlane.xlu0 %243
    %245 = vmax.xlane.f32.xlu0 %v242
    %v246 = vpop.xlane.xlu0 %245
    %v247 = vsub.f32 %v241, %v244
    %v248 = vsub.f32 %v242, %v246
    %v249 = vmul.f32 %v247, 1.442695
    %v250 = vpow.pop %v249
    %v251 = vmul.f32 %v248, 1.442695
    %v252 = vpow.pop %v251
    %253 = vadd.xlane.f32.xlu0 %v250
    %v254 = vpop.xlane.xlu0 %253
    %255 = vadd.xlane.f32.xlu0 %v252
    %v256 = vpop.xlane.xlu0 %255
    %v257 = vlog2.pop %v254
    %v258 = vmul.f32 %v257, 0.6931472
    %v259 = vlog2.pop %v256
    %v260 = vmul.f32 %v259, 0.6931472
    %v261 = vsub.f32 %v247, %v258
    %v262 = vsub.f32 %v248, %v260
    %263 = vst [vmem:[#allocation5] sm:$0xff] %v261
    %264 = vst [vmem:[#allocation5 + $0x8] sm:$0xff] %v262
    // Predicated region
    $region26: #{tpu_custom_call.1} parent=1 // pred_check
      _
    $region27: #{tpu_custom_call.1} parent=1 // pred_check_branch
      %266 = sbr.rel (0) target = $region29
    $region28: #{tpu_custom_call.1} parent=1 // pred_region
      %s268 = ssub.s32 256, 256
      %269 = vsyncadd [#allocation4], %s268
      %s270 = sshll.u32 [#allocation5], 4
      %s271 = int_to_ptr.vmem [resolvable:$true] %s270
      %276 = dma.vmem_to_hbm [thread:$0]  %s271, 256, %s5, [#allocation4], 128, 128, 8
    $region29: #{tpu_custom_call.1} parent=1 // pred_fallthru
      _
    // Predicated region
    $region30: #{tpu_custom_call.1} parent=1 // pred_check
      _
    $region31: #{tpu_custom_call.1} parent=1 // pred_check_branch
      %278 = sbr.rel (0) target = $region33
    $region32: #{tpu_custom_call.1} parent=1 // pred_region
      %279 = dma.done [#allocation4], 256
    $region33: #{tpu_custom_call.1} parent=1 // pred_fallthru
      _
    %280 = vsyncpa [#allocation3], 1
    %281 = vsyncpa [#allocation4], 1

</llo_original>
